<compile_context>
chip_gen: v5e
topology: v5e:2x2
jax: 0.10.0
libtpu: 0.0.40
codegen_flags: <defaults>
</compile_context>

<pallas_src>
import jax
import jax.numpy as jnp
import numpy as np
from jax.experimental import pallas as pl
from jax.experimental.pallas import tpu as pltpu


_LANE_CANDIDATES = (2048, 1024, 512, 256, 128)   # widest lane dim first
_SMALL_INPUT_ELEMS = 1024                        # below this, plain JAX wins
_TARGET_BLOCK_BYTES = 1 << 20                    # ~1 MiB input block per grid step
                                                 # (2 bufs x (in+out) ~= 4 MiB << 16 MiB v5e scoped VMEM)


def _add_one_kernel(x_ref, o_ref):
    # Elementwise hot path: VPU add over one VMEM tile.
    o_ref[...] = x_ref[...] + jnp.asarray(1, dtype=o_ref.dtype)


def _tiled_add_one(x2d: jax.Array) -> jax.Array:
    """Run the +1 kernel over a (rows, lane) slab with a pipelined 1-D grid."""
    rows, lane = x2d.shape
    itemsize = np.dtype(x2d.dtype).itemsize

    # ~1 MiB input blocks; rows-per-block is a multiple of 8 (vreg sublane).
    rows_per_block = _TARGET_BLOCK_BYTES // (lane * itemsize)
    rows_per_block = max(8, (rows_per_block // 8) * 8)
    rows_per_block = min(rows, rows_per_block)

    grid = (pl.cdiv(rows, rows_per_block),)
    return pl.pallas_call(
        _add_one_kernel,
        out_shape=jax.ShapeDtypeStruct(x2d.shape, x2d.dtype),
        grid_spec=pl.GridSpec(
            grid=grid,
            in_specs=[pl.BlockSpec((rows_per_block, lane), lambda i: (i, 0))],
            out_specs=pl.BlockSpec((rows_per_block, lane), lambda i: (i, 0)),
        ),
        # Grid steps are independent -> "parallel" lets v7x shard them across
        # both TensorCores; v5e/v6e simply software-pipeline them.
        compiler_params=pltpu.CompilerParams(
            dimension_semantics=("parallel",),
        ),
        # NOTE: input_output_aliases={0: 0} would halve peak HBM footprint but
        # only pays off when the caller donates x; left off so non-donated
        # inputs don't pick up a defensive XLA copy.
    )(x2d)


def tudui_forward(x: jax.Array) -> jax.Array:
    """Pallas implementation of Tudui.forward: output = input + 1."""
    x = jnp.asarray(x)
    orig_shape = x.shape
    n = x.size

    # Tiny inputs (incl. the scalar from the original script): kernel launch
    # plus the (8,128) tile blow-up costs more than a fused XLA add.
    if n < _SMALL_INPUT_ELEMS:
        return x + jnp.asarray(1, dtype=x.dtype)

    flat = x.reshape(-1)  # contiguous reshape: layout-preserving, no copy

    # Fast path: fold exactly into a lane-dense (8k, L) slab -- zero padding,
    # zero wrapper copies. Prefer the widest lane dim that divides n.
    for lane in _LANE_CANDIDATES:
        if n % (8 * lane) == 0:
            out2d = _tiled_add_one(flat.reshape(n // lane, lane))
            return out2d.reshape(orig_shape)

    # Slow path: kernel on the largest (8,128)-aligned prefix; the < 1024
    # element tail is a plain JAX add (no full-array pad/slice copies).
    lane = 128
    main = (n // (8 * lane)) * (8 * lane)
    head = _tiled_add_one(flat[:main].reshape(main // lane, lane)).reshape(-1)
    tail = flat[main:] + jnp.asarray(1, dtype=x.dtype)
    return jnp.concatenate([head, tail]).reshape(orig_shape)


if __name__ == "__main__":
    key = jax.random.PRNGKey(0)
    k1, k2, k3 = jax.random.split(key, 3)

    # Small NCHW-style tensor (2048 elems): exercises the aligned fast path.
    x = jax.random.normal(k1, (2, 4, 16, 16), dtype=jnp.float32)
    out = tudui_forward(x)
    jax.block_until_ready(out)
    assert out.shape == x.shape
    assert jnp.allclose(out, x + 1.0), "mismatch vs reference (aligned path)"

    # Larger tensor (2 MiB f32): exercises the multi-step pipelined grid
    # (wide 2048-lane slab split into several ~1 MiB blocks).
    x_big = jax.random.normal(k2, (4, 8, 128, 128), dtype=jnp.float32)
    out_big = tudui_forward(x_big)
    jax.block_until_ready(out_big)
    assert jnp.allclose(out_big, x_big + 1.0), "mismatch vs reference (tiled path)"

    # Awkward size (1155 elems): exercises the aligned-prefix + JAX-tail path.
    x_odd = jax.random.normal(k3, (3, 5, 7, 11), dtype=jnp.float32)
    out_odd = tudui_forward(x_odd)
    jax.block_until_ready(out_odd)
    assert out_odd.shape == x_odd.shape
    assert jnp.allclose(out_odd, x_odd + 1.0), "mismatch vs reference (tail path)"

    # Scalar input, matching `x = torch.tensor(1.0)` from the original script.
    x_scalar = jnp.asarray(1.0, dtype=jnp.float32)
    out_scalar = tudui_forward(x_scalar)
    jax.block_until_ready(out_scalar)
    assert out_scalar.shape == ()
    assert jnp.allclose(out_scalar, 2.0), "scalar mismatch vs reference"

    print("KERNEL_OK")
</pallas_src>

<mosaic_0001>
module attributes {stable_mosaic.version = 11 : i64} {
  func.func @_add_one_kernel(%arg0: i32, %arg1: memref<8x256xf32, #tpu.memory_space<vmem>>, %arg2: memref<8x256xf32, #tpu.memory_space<vmem>>) attributes {dimension_semantics = [#tpu.dimension_semantics<parallel>], iteration_bounds = array<i64: 1>, scalar_prefetch = 0 : i64, scratch_operands = 0 : i64, tpu.core_type = #tpu.core_type<tc>, window_params = [{transform_indices = @transform_0, window_bounds = array<i64: 8, 256>}, {transform_indices = @transform_1, window_bounds = array<i64: 8, 256>}]} {
    %c0 = arith.constant 0 : index
    %c0_0 = arith.constant 0 : index
    %0 = vector.load %arg1[%c0, %c0_0] : memref<8x256xf32, #tpu.memory_space<vmem>>, vector<8x256xf32>
    %cst = arith.constant 1.000000e+00 : f32
    %1 = vector.broadcast %cst : f32 to vector<8x256xf32>
    %2 = arith.addf %0, %1 : vector<8x256xf32>
    %c0_1 = arith.constant 0 : index
    %c0_2 = arith.constant 0 : index
    %3 = vector.load %arg2[%c0_1, %c0_2] : memref<8x256xf32, #tpu.memory_space<vmem>>, vector<8x256xf32>
    tpu.vector_store %arg2[%c0_1, %c0_2], %2 {strides = array<i32>} : memref<8x256xf32, #tpu.memory_space<vmem>>, vector<8x256xf32>,
    return
  }
  func.func @transform_0(%arg0: i32) -> (i32, i32) {
    %c0_i32 = arith.constant 0 : i32
    %c0_i32_0 = arith.constant 0 : i32
    return %arg0, %c0_i32 : i32, i32
  }
  func.func @transform_1(%arg0: i32) -> (i32, i32) {
    %c0_i32 = arith.constant 0 : i32
    %c0_i32_0 = arith.constant 0 : i32
    return %arg0, %c0_i32 : i32, i32
  }
}

</mosaic_0001>

<llo_original>
// kernel: tpu_custom_call.1
$region0: #{tpu_custom_call.1}
  #allocation0 [shape = 'u32[]', space=smem, size = 0x4, offset = 0x4, fixed_abs, tag = 'smem constant byte address 0x4 - core index']
  #allocation1 [shape = 'u32[72,128]{1,0:T(1,128)}', space=vmem, size = 0x9000, scoped, tag = 'internal scratch']
  %s0 = inlined_call_operand.hbm [shape: f32[8,256], index: 0, kind: input, shape index: {}]
  %s1 = inlined_call_operand.hbm [shape: f32[8,256], index: 1, kind: output, shape index: {}]
  %s2 = sld [smem:[#allocation0]]
  $region18: #{tpu_custom_call.1} parent=0
    _
  %s4 = ssub.s32 1, %s2
  %s5 = scalar_select 0, %s4, %s2
  $region1: #{tpu_custom_call.1} parent=0
    #allocation2 [shape = 'u8[8192]{0}', space=vmem, size = 0x2000, scoped, tag = 'input window, operand 0, single buffered']
    #allocation3 [shape = 's32[1]{0}', space=sflag, size = 0x4, scoped, tag = 'scoped memory for tpu_custom_call.1']
    #allocation4 [shape = 's32[1]{0}', space=sflag, size = 0x4, scoped, tag = 'scoped memory for tpu_custom_call.1']
    #allocation5 [shape = 'u8[8192]{0}', space=vmem, size = 0x2000, scoped, tag = 'output window, operand 0, single buffered']
    %6 = vsyncpa [#allocation3], 0
    %7 = vsyncpa [#allocation4], 0
    // Predicated region
    $region2: #{tpu_custom_call.1} parent=1 // pred_check
      _
    $region3: #{tpu_custom_call.1} parent=1 // pred_check_branch
      %9 = sbr.rel (0) target = $region5
    $region4: #{tpu_custom_call.1} parent=1 // pred_region
      %11 = vsyncadd [#allocation3], 0
      %s13 = sshll.u32 %s0, 4
      %s14 = int_to_ptr.hbm [resolvable:$true] %s13
      %s15 = sshll.u32 [#allocation2], 4
      %s16 = int_to_ptr.vmem [resolvable:$true] %s15
      %18 = dma.hbm_to_vmem [thread:$0]  %s14, 256, %s16, [#allocation3]
    $region5: #{tpu_custom_call.1} parent=1 // pred_fallthru
      _
    // Predicated region
    $region6: #{tpu_custom_call.1} parent=1 // pred_check
      _
    $region7: #{tpu_custom_call.1} parent=1 // pred_check_branch
      %20 = sbr.rel (0) target = $region9
    $region8: #{tpu_custom_call.1} parent=1 // pred_region
      %22 = dma.done [#allocation3], 256
    $region9: #{tpu_custom_call.1} parent=1 // pred_fallthru
      _
    %v23 = vld [vmem:[#allocation2] sm:$0xff]
    %v24 = vld [vmem:[#allocation2 + $0x8] sm:$0xff]
    %v25 = vadd.f32 %v23, 1.0
    %v26 = vadd.f32 %v24, 1.0
    %27 = vst [vmem:[#allocation5] sm:$0xff] %v25
    %28 = vst [vmem:[#allocation5 + $0x8] sm:$0xff] %v26
    // Predicated region
    $region10: #{tpu_custom_call.1} parent=1 // pred_check
      _
    $region11: #{tpu_custom_call.1} parent=1 // pred_check_branch
      %30 = sbr.rel (0) target = $region13
    $region12: #{tpu_custom_call.1} parent=1 // pred_region
      %32 = vsyncadd [#allocation4], 0
      %s34 = sshll.u32 [#allocation5], 4
      %s35 = int_to_ptr.vmem [resolvable:$true] %s34
      %s36 = sshll.u32 %s1, 4
      %s37 = int_to_ptr.hbm [resolvable:$true] %s36
      %39 = dma.vmem_to_hbm [thread:$0]  %s35, 256, %s37, [#allocation4]
    $region13: #{tpu_custom_call.1} parent=1 // pred_fallthru
      _
    // Predicated region
    $region14: #{tpu_custom_call.1} parent=1 // pred_check
      _
    $region15: #{tpu_custom_call.1} parent=1 // pred_check_branch
      %41 = sbr.rel (0) target = $region17
    $region16: #{tpu_custom_call.1} parent=1 // pred_region
      %43 = dma.done [#allocation4], 256
    $region17: #{tpu_custom_call.1} parent=1 // pred_fallthru
      _
    %44 = vsyncpa [#allocation3], 1
    %45 = vsyncpa [#allocation4], 1

</llo_original>
